<compile_context>
chip_gen: v5e
topology: v5e:2x2
jax: 0.10.0
libtpu: 0.0.40
codegen_flags: <defaults>
</compile_context>

<pallas_src>
import functools

import jax
import jax.numpy as jnp
from jax.experimental import pallas as pl
from jax.experimental.pallas import tpu as pltpu


def _focal_loss_kernel(pred_ref, label_ref, out_ref, acc_ref, *,
                       gamma, alpha, inv_c, n_rows, tile_n, has_tail):
    """Processes one (tile_n, C) row-tile; accumulates elementwise into VMEM."""
    i = pl.program_id(0)

    @pl.when(i == 0)
    def _init():
        acc_ref[...] = jnp.zeros_like(acc_ref)

    x = pred_ref[...].astype(jnp.float32)
    z = label_ref[...].astype(jnp.float32)

    # Single transcendental: e = exp(-|x|) feeds both the numerically stable
    # BCE-with-logits term and the sigmoid.
    e = jnp.exp(-jnp.abs(x))
    bce = jnp.maximum(x, 0.0) - x * z + jnp.log1p(e)

    d = 1.0 / (1.0 + e)                       # sigmoid(|x|)
    p = jnp.where(x >= 0.0, d, 1.0 - d)       # sigmoid(x)

    # om = 1 - p_t, where p_t = z*p + (1-z)*(1-p)   ==>   om = p + z*(1 - 2p)
    om = p + z * (1.0 - 2.0 * p)

    if gamma == 1.0:
        mod = om
    elif gamma == 1.5:
        mod = om * jax.lax.sqrt(om)           # (1 - p_t) ** 1.5
    elif gamma == 2.0:
        mod = om * om
    else:
        # general gamma: explicit exp/log, guarded at om == 0 (forward only)
        mod = jnp.exp(gamma * jnp.log(jnp.maximum(om, 1e-30)))

    loss = bce * mod
    if alpha > 0:
        # z*alpha + (1-z)*(1-alpha)  ==  (1-alpha) + z*(2*alpha - 1)
        loss = loss * ((1.0 - alpha) + z * (2.0 * alpha - 1.0))

    if has_tail:
        # Mask out padded rows of the (cdiv) boundary block.
        rows = i * tile_n + jax.lax.broadcasted_iota(jnp.int32, loss.shape, 0)
        loss = jnp.where(rows < n_rows, loss, 0.0)

    # Pure-VPU elementwise accumulation; the XLU reduce happens once, below.
    acc_ref[...] += loss

    @pl.when(i == pl.num_programs(0) - 1)
    def _finalize():
        # mean over classes then sum over samples == sum(all) / C
        out_ref[0, 0] = jnp.sum(acc_ref[...]) * inv_c


def _pick_tile_n(n, c, requested):
    """Largest multiple-of-8 row tile that keeps tiles comfortably in VMEM."""
    max_tile_elems = 1 << 19          # ~2 MiB per f32 buffer; safe for v7x 64 MiB VMEM
    cap = max(8, ((max_tile_elems // max(c, 1)) // 8) * 8)
    if n < 8:
        return n                      # block dim == full array dim is allowed
    t = min(int(requested), cap, (n // 8) * 8)
    return max(8, (t // 8) * 8)


def focal_loss(pred, label, gamma=1.5, alpha=0.25, tile_n=1024):
    N, C = pred.shape
    tile_n = _pick_tile_n(N, C, tile_n)
    grid_n = pl.cdiv(N, tile_n)
    has_tail = (N % tile_n) != 0

    kernel = functools.partial(
        _focal_loss_kernel, gamma=float(gamma), alpha=float(alpha),
        inv_c=float(1.0 / C), n_rows=N, tile_n=tile_n, has_tail=has_tail)

    out = pl.pallas_call(
        kernel,
        out_shape=jax.ShapeDtypeStruct((1, 1), jnp.float32),
        grid_spec=pltpu.PrefetchScalarGridSpec(
            num_scalar_prefetch=0,
            grid=(grid_n,),
            in_specs=[
                pl.BlockSpec((tile_n, C), lambda i: (i, 0)),
                pl.BlockSpec((tile_n, C), lambda i: (i, 0)),
            ],
            out_specs=pl.BlockSpec(memory_space=pltpu.SMEM),
            scratch_shapes=[pltpu.VMEM((tile_n, C), jnp.float32)],
        ),
        # Accumulator is carried across the grid axis -> must stay "arbitrary".
        # TODO(synk): emit per-core partial sums + "parallel" axis to use both
        # v7x TensorCores; single-TC v5e/v6e gain nothing from it.
        compiler_params=pltpu.CompilerParams(
            dimension_semantics=("arbitrary",)),
    )(pred, label)
    return out[0, 0]


def focal_loss_ref(pred, label, gamma=1.5, alpha=0.25):
    """Pure-JAX reference matching the PyTorch forward exactly."""
    x = pred.astype(jnp.float32)
    z = label.astype(jnp.float32)
    bce = jnp.maximum(x, 0.0) - x * z + jnp.log1p(jnp.exp(-jnp.abs(x)))
    p = jax.nn.sigmoid(x)
    p_t = z * p + (1 - z) * (1 - p)
    loss = bce * (1.0 - p_t) ** gamma
    if alpha > 0:
        loss = loss * (z * alpha + (1 - z) * (1 - alpha))
    return loss.mean(axis=1).sum()


if __name__ == "__main__":
    key = jax.random.PRNGKey(0)
    k1, k2 = jax.random.split(key)

    # Small shape; N=20 deliberately not a multiple of the tile to exercise
    # the masked-tail path (tile_n -> 16, grid -> 2).
    N, C = 20, 128
    pred = jax.random.normal(k1, (N, C), dtype=jnp.float32) * 2.0
    label = (jax.random.uniform(k2, (N, C)) > 0.5).astype(jnp.float32)

    out = jax.block_until_ready(focal_loss(pred, label))
    ref = focal_loss_ref(pred, label)
    assert jnp.allclose(out, ref, rtol=1e-5, atol=1e-5), (out, ref)

    print("KERNEL_OK")
</pallas_src>

<mosaic_0001>
module attributes {stable_mosaic.version = 11 : i64} {
  func.func @_focal_loss_kernel(%arg0: i32, %arg1: memref<16x128xf32, #tpu.memory_space<vmem>>, %arg2: memref<16x128xf32, #tpu.memory_space<vmem>>, %arg3: memref<1x1xf32, #tpu.memory_space<smem>>, %arg4: memref<16x128xf32, #tpu.memory_space<vmem>>) attributes {dimension_semantics = [#tpu.dimension_semantics<arbitrary>], iteration_bounds = array<i64: 2>, scalar_prefetch = 0 : i64, scratch_operands = 1 : i64, tpu.core_type = #tpu.core_type<tc>, window_params = [{transform_indices = @transform_0, window_bounds = array<i64: 16, 128>}, {transform_indices = @transform_1, window_bounds = array<i64: 16, 128>}, {transform_indices = @transform_2, window_bounds = array<i64: 1, 1>}]} {
    %c0_i32 = arith.constant 0 : i32
    %0 = arith.cmpi eq, %arg0, %c0_i32 : i32
    %1 = arith.extui %0 : i1 to i32
    %c0_i32_0 = arith.constant 0 : i32
    %2 = arith.cmpi ne, %1, %c0_i32_0 : i32
    scf.if %2 {
      %cst_19 = arith.constant 0.000000e+00 : f32
      %52 = vector.broadcast %cst_19 : f32 to vector<16x128xf32>
      %c0_20 = arith.constant 0 : index
      %c0_21 = arith.constant 0 : index
      %53 = vector.load %arg4[%c0_20, %c0_21] : memref<16x128xf32, #tpu.memory_space<vmem>>, vector<16x128xf32>
      tpu.vector_store %arg4[%c0_20, %c0_21], %52 {strides = array<i32>} : memref<16x128xf32, #tpu.memory_space<vmem>>, vector<16x128xf32>,
    } else {
    }
    %c0 = arith.constant 0 : index
    %c0_1 = arith.constant 0 : index
    %3 = vector.load %arg1[%c0, %c0_1] : memref<16x128xf32, #tpu.memory_space<vmem>>, vector<16x128xf32>
    %c0_2 = arith.constant 0 : index
    %c0_3 = arith.constant 0 : index
    %4 = vector.load %arg2[%c0_2, %c0_3] : memref<16x128xf32, #tpu.memory_space<vmem>>, vector<16x128xf32>
    %5 = math.absf %3 : vector<16x128xf32>
    %cst = arith.constant 0.000000e+00 : f32
    %6 = vector.broadcast %cst : f32 to vector<16x128xf32>
    %7 = arith.subf %6, %5 : vector<16x128xf32>
    %8 = math.exp %7 : vector<16x128xf32>
    %cst_4 = arith.constant 0.000000e+00 : f32
    %9 = vector.broadcast %cst_4 : f32 to vector<16x128xf32>
    %10 = arith.maximumf %3, %9 : vector<16x128xf32>
    %11 = arith.mulf %3, %4 : vector<16x128xf32>
    %12 = arith.subf %10, %11 : vector<16x128xf32>
    %13 = math.log1p %8 : vector<16x128xf32>
    %14 = arith.addf %12, %13 : vector<16x128xf32>
    %cst_5 = arith.constant 1.000000e+00 : f32
    %15 = vector.broadcast %cst_5 : f32 to vector<16x128xf32>
    %16 = arith.addf %15, %8 : vector<16x128xf32>
    %cst_6 = arith.constant 1.000000e+00 : f32
    %17 = vector.broadcast %cst_6 : f32 to vector<16x128xf32>
    %18 = arith.divf %17, %16 : vector<16x128xf32>
    %cst_7 = arith.constant 0.000000e+00 : f32
    %19 = vector.broadcast %cst_7 : f32 to vector<16x128xf32>
    %20 = arith.cmpf oge, %3, %19 : vector<16x128xf32>
    %cst_8 = arith.constant 1.000000e+00 : f32
    %21 = vector.broadcast %cst_8 : f32 to vector<16x128xf32>
    %22 = arith.subf %21, %18 : vector<16x128xf32>
    %23 = arith.select %20, %18, %22 : vector<16x128xi1>, vector<16x128xf32>
    %cst_9 = arith.constant 2.000000e+00 : f32
    %24 = vector.broadcast %cst_9 : f32 to vector<16x128xf32>
    %25 = arith.mulf %24, %23 : vector<16x128xf32>
    %cst_10 = arith.constant 1.000000e+00 : f32
    %26 = vector.broadcast %cst_10 : f32 to vector<16x128xf32>
    %27 = arith.subf %26, %25 : vector<16x128xf32>
    %28 = arith.mulf %4, %27 : vector<16x128xf32>
    %29 = arith.addf %23, %28 : vector<16x128xf32>
    %30 = math.sqrt %29 : vector<16x128xf32>
    %31 = arith.mulf %29, %30 : vector<16x128xf32>
    %32 = arith.mulf %14, %31 : vector<16x128xf32>
    %cst_11 = arith.constant -5.000000e-01 : f32
    %33 = vector.broadcast %cst_11 : f32 to vector<16x128xf32>
    %34 = arith.mulf %4, %33 : vector<16x128xf32>
    %cst_12 = arith.constant 7.500000e-01 : f32
    %35 = vector.broadcast %cst_12 : f32 to vector<16x128xf32>
    %36 = arith.addf %35, %34 : vector<16x128xf32>
    %37 = arith.mulf %32, %36 : vector<16x128xf32>
    %c16_i32 = arith.constant 16 : i32
    %38 = arith.muli %arg0, %c16_i32 : i32
    %39 = tpu.iota {dimensions = array<i32: 0>} : vector<16x128xi32>
    %40 = vector.broadcast %38 : i32 to vector<16x128xi32>
    %41 = arith.addi %40, %39 : vector<16x128xi32>
    %c20_i32 = arith.constant 20 : i32
    %42 = vector.broadcast %c20_i32 : i32 to vector<16x128xi32>
    %43 = arith.cmpi slt, %41, %42 : vector<16x128xi32>
    %cst_13 = arith.constant 0.000000e+00 : f32
    %44 = vector.broadcast %cst_13 : f32 to vector<16x128xf32>
    %45 = arith.select %43, %37, %44 : vector<16x128xi1>, vector<16x128xf32>
    %c0_14 = arith.constant 0 : index
    %c0_15 = arith.constant 0 : index
    %46 = vector.load %arg4[%c0_14, %c0_15] : memref<16x128xf32, #tpu.memory_space<vmem>>, vector<16x128xf32>
    %47 = arith.addf %46, %45 : vector<16x128xf32>
    %c0_16 = arith.constant 0 : index
    %c0_17 = arith.constant 0 : index
    %48 = vector.load %arg4[%c0_16, %c0_17] : memref<16x128xf32, #tpu.memory_space<vmem>>, vector<16x128xf32>
    tpu.vector_store %arg4[%c0_16, %c0_17], %47 {strides = array<i32>} : memref<16x128xf32, #tpu.memory_space<vmem>>, vector<16x128xf32>,
    %c1_i32 = arith.constant 1 : i32
    %49 = arith.cmpi eq, %arg0, %c1_i32 : i32
    %50 = arith.extui %49 : i1 to i32
    %c0_i32_18 = arith.constant 0 : i32
    %51 = arith.cmpi ne, %50, %c0_i32_18 : i32
    scf.if %51 {
      %c0_19 = arith.constant 0 : index
      %c0_20 = arith.constant 0 : index
      %52 = vector.load %arg4[%c0_19, %c0_20] : memref<16x128xf32, #tpu.memory_space<vmem>>, vector<16x128xf32>
      %53 = vector.shape_cast %52 : vector<16x128xf32> to vector<1x16x128xf32>
      %cst_21 = arith.constant dense<0.000000e+00> : vector<1xf32>
      %54 = vector.multi_reduction <add>, %53, %cst_21 [1, 2] : vector<1x16x128xf32> to vector<1xf32>
      %55 = vector.shape_cast %54 : vector<1xf32> to vector<1x1x1xf32>
      %56 = vector.extract %55[0, 0, 0] : f32 from vector<1x1x1xf32>
      %cst_22 = arith.constant 7.812500e-03 : f32
      %57 = arith.mulf %56, %cst_22 : f32
      %c0_23 = arith.constant 0 : index
      %c0_24 = arith.constant 0 : index
      %58 = memref.load %arg3[%c0_23, %c0_24] : memref<1x1xf32, #tpu.memory_space<smem>>
      memref.store %57, %arg3[%c0_23, %c0_24] : memref<1x1xf32, #tpu.memory_space<smem>>
    } else {
    }
    return
  }
  func.func @transform_0(%arg0: i32) -> (i32, i32) {
    %c0_i32 = arith.constant 0 : i32
    %c0_i32_0 = arith.constant 0 : i32
    return %arg0, %c0_i32 : i32, i32
  }
  func.func @transform_1(%arg0: i32) -> (i32, i32) {
    %c0_i32 = arith.constant 0 : i32
    %c0_i32_0 = arith.constant 0 : i32
    return %arg0, %c0_i32 : i32, i32
  }
  func.func @transform_2(%arg0: i32) -> (i32, i32) {
    %c0_i32 = arith.constant 0 : i32
    %c0_i32_0 = arith.constant 0 : i32
    %c0_i32_1 = arith.constant 0 : i32
    return %c0_i32, %c0_i32_0 : i32, i32
  }
}

</mosaic_0001>

<llo_original>
// kernel: tpu_custom_call.1
$region0: #{tpu_custom_call.1}
  #allocation0 [shape = 'u32[]', space=smem, size = 0x4, offset = 0x4, fixed_abs, tag = 'smem constant byte address 0x4 - core index']
  #allocation1 [shape = 'u32[72,128]{1,0:T(1,128)}', space=vmem, size = 0x9000, scoped, tag = 'internal scratch']
  #allocation2 [shape = 'f32[16,128]{1,0:T(8,128)}', space=vmem, size = 0x2000, scoped, tag = 'scratch operand']
  %s0 = inlined_call_operand.hbm [shape: f32[20,128], index: 0, kind: input, shape index: {}]
  %s1 = inlined_call_operand.hbm [shape: f32[20,128], index: 1, kind: input, shape index: {}]
  %s2 = inlined_call_operand.hbm [shape: f32[1,1], index: 2, kind: output, shape index: {}]
  %s3 = sld [smem:[#allocation0]]
  $region57: #{tpu_custom_call.1} parent=0
    _
  %s5 = ssub.s32 1, %s3
  %s6 = scalar_select 0, %s5, %s3
  $region1: #{tpu_custom_call.1} parent=0
    #allocation3 [shape = 'u8[16384]{0}', space=vmem, size = 0x4000, scoped, tag = 'input window, operand 0']
    #allocation4 [shape = 's32[2]{0}', space=sflag, size = 0x8, scoped, tag = 'scoped memory for tpu_custom_call.1']
    #allocation5 [shape = 's32[2]{0}', space=sflag, size = 0x8, scoped, tag = 'scoped memory for tpu_custom_call.1']
    #allocation6 [shape = 'u8[16384]{0}', space=vmem, size = 0x4000, scoped, tag = 'input window, operand 1']
    #allocation7 [shape = 's32[2]{0}', space=sflag, size = 0x8, scoped, tag = 'scoped memory for tpu_custom_call.1']
    #allocation8 [shape = 'u8[512]{0}', space=smem, size = 0x200, scoped, tag = 'output window, operand 0, single buffered']
    %7 = vsyncpa [#allocation4], 0
    %s8 = scalar_lea.sflag [#allocation4], 1
    %9 = vsyncpa %s8, 0
    %10 = vsyncpa [#allocation7], 0
    %s11 = scalar_lea.sflag [#allocation7], 1
    %12 = vsyncpa %s11, 0
    %13 = vsyncpa [#allocation5], 0
    loop: start=0, step=1, limit=4
    $region2: #{tpu_custom_call.1} parent=1 // loop_pre_header
      _
    $region3: #{tpu_custom_call.1} parent=1 // loop_header
      %s15 = sphi 0, %s19
      %p16 = scmp.ge.s32.totalorder %s15, 4
      %s25 = sphi 0, %s27
      %s28 = sphi 0, %s25
      %s29 = sphi 0, %s28
      %s45 = sphi 0, %s29
      %s51 = sphi 0, %s53
      %s54 = sphi 0, %s51
      %s55 = sphi 0, %s54
      %s71 = sphi 0, %s55
      %s75 = sphi 0, %s75
      %s77 = sphi 0, %s75
      %s78 = sphi 0, %s77
      %s92 = sphi 0, %s78
    $region4: #{tpu_custom_call.1} parent=1 // loop_header_branch
      %18 = sbr.rel (%p16) target = $region8
    $region5: #{tpu_custom_call.1} parent=1 // loop_body
      %s20 = ssub.s32 %s15, 1
      %s21 = ssub.s32 %s15, 2
      %s22 = sadd.s32 %s15, 1
      %s23 = ssub.s32 %s15, %s22
      %p24 = scmp.eq.s32.totalorder %s23, 0
      %s26 = sadd.s32 %s25, 1
      %s27 = scalar_select %p24, %s25, %s26
      %p30 = pneg %p24
      %p31 = scmp.eq.s32.totalorder %s15, 1
      %p32 = por %p30, %p31
      %p33 = scmp.ne.s32.totalorder %s25, %s28
      %p34 = scmp.eq.s32.totalorder %s15, 0
      %p35 = por %p33, %p34
      %p36 = scmp.ne.s32.totalorder %s25, %s28
      %p37 = scmp.eq.s32.totalorder %s20, 1
      %p38 = por %p36, %p37
      %p39 = scmp.ne.s32.totalorder %s28, %s29
      %p40 = scmp.eq.s32.totalorder %s20, 0
      %p41 = por %p39, %p40
      %p42 = scmp.ne.s32.totalorder %s28, %s29
      %p43 = scmp.eq.s32.totalorder %s21, 1
      %p44 = por %p42, %p43
      %p46 = scmp.ne.s32.totalorder %s29, %s45
      %p47 = scmp.eq.s32.totalorder %s21, 0
      %p48 = por %p46, %p47
      %s49 = ssub.s32 %s15, %s22
      %p50 = scmp.eq.s32.totalorder %s49, 0
      %s52 = sadd.s32 %s51, 1
      %s53 = scalar_select %p50, %s51, %s52
      %p56 = pneg %p50
      %p57 = scmp.eq.s32.totalorder %s15, 1
      %p58 = por %p56, %p57
      %p59 = scmp.ne.s32.totalorder %s51, %s54
      %p60 = scmp.eq.s32.totalorder %s15, 0
      %p61 = por %p59, %p60
      %p62 = scmp.ne.s32.totalorder %s51, %s54
      %p63 = scmp.eq.s32.totalorder %s20, 1
      %p64 = por %p62, %p63
      %p65 = scmp.ne.s32.totalorder %s54, %s55
      %p66 = scmp.eq.s32.totalorder %s20, 0
      %p67 = por %p65, %p66
      %p68 = scmp.ne.s32.totalorder %s54, %s55
      %p69 = scmp.eq.s32.totalorder %s21, 1
      %p70 = por %p68, %p69
      %p72 = scmp.ne.s32.totalorder %s55, %s71
      %p73 = scmp.eq.s32.totalorder %s21, 0
      %p74 = por %p72, %p73
      %s76 = sadd.s32 %s75, 1
      %p79 = scmp.eq.s32.totalorder %s15, 1
      %p80 = scmp.ne.s32.totalorder %s75, %s77
      %p81 = scmp.eq.s32.totalorder %s15, 0
      %p82 = por %p80, %p81
      %p83 = scmp.ne.s32.totalorder %s75, %s77
      %p84 = scmp.eq.s32.totalorder %s20, 1
      %p85 = por %p83, %p84
      %p86 = scmp.ne.s32.totalorder %s77, %s78
      %p87 = scmp.eq.s32.totalorder %s20, 0
      %p88 = por %p86, %p87
      %p89 = scmp.ne.s32.totalorder %s77, %s78
      %p90 = scmp.eq.s32.totalorder %s21, 1
      %p91 = por %p89, %p90
      %p93 = scmp.ne.s32.totalorder %s78, %s92
      %p94 = scmp.eq.s32.totalorder %s21, 0
      %p95 = por %p93, %p94
      %p96 = scmp.le.s32.totalorder 1, %s15
      %p97 = scmp.lt.s32.totalorder %s15, 3
      %p98 = pnand %p96, %p97
      %p99 = pneg %p98
      // Predicated region
      $region9: #{tpu_custom_call.1} parent=5 // pred_check
        _
      $region10: #{tpu_custom_call.1} parent=5 // pred_check_branch
        %101 = sbr.rel (%p98) target = $region12
      $region11: #{tpu_custom_call.1} parent=5 // pred_region
        %s102 = ssub.s32 %s15, 1
      $region12: #{tpu_custom_call.1} parent=5 // pred_fallthru
        _
      %p103 = scmp.lt.s32.totalorder %s15, 2
      // Predicated region
      $region13: #{tpu_custom_call.1} parent=5 // pred_check
        %p104 = pneg %p103
      $region14: #{tpu_custom_call.1} parent=5 // pred_check_branch
        %106 = sbr.rel (%p104) target = $region16
      $region15: #{tpu_custom_call.1} parent=5 // pred_region
        // Predicated region
        $region17: #{tpu_custom_call.1} parent=15 // pred_check
          %p107 = pneg %p35
        $region18: #{tpu_custom_call.1} parent=15 // pred_check_branch
          %109 = sbr.rel (%p107) target = $region20
        $region19: #{tpu_custom_call.1} parent=15 // pred_region
          %s110 = sand.u32 %s25, 1
          %s111 = scalar_lea.sflag [#allocation4], %s110
          %s112 = sand.u32 %s25, 1
          %s113 = smul.addr %s112, 16
          %s114 = scalar_lea.vmem [#allocation3], %s113
          %s115 = smul.u32 2, %s15
          %s116 = ssub.s32 3, %s115
          %p117 = scmp.lt.s32.totalorder %s116, 2
          %s118 = scalar_select %p117, %s116, 2
          %s119 = smul.u32 8, %s118
          %s120 = ssub.s32 16, %s119
          %s121 = sshll.u32 %s120, 4
          %122 = vsyncadd %s111, %s121
          %p123 = scmp.ne.s32.totalorder 0, %s119
          %s124 = smul.addr %s115, 8
          %s125 = scalar_lea.hbm %s0, %s124
          %s126 = smul.u32 8, %s118
          %s127 = sshll.u32 %s125, 4
          %s128 = int_to_ptr.hbm [resolvable:$true] %s127
          %s129 = sshll.u32 %s114, 4
          %s130 = int_to_ptr.vmem [resolvable:$true] %s129
          %s131 = sshll.u32 %s126, 4
          %135 = dma.hbm_to_vmem [thread:$0]  (%p123), %s128, %s131, %s130, %s111, 128, 128, 8
        $region20: #{tpu_custom_call.1} parent=15 // pred_fallthru
          _
        // Predicated region
        $region21: #{tpu_custom_call.1} parent=15 // pred_check
          %p136 = pneg %p61
        $region22: #{tpu_custom_call.1} parent=15 // pred_check_branch
          %138 = sbr.rel (%p136) target = $region24
        $region23: #{tpu_custom_call.1} parent=15 // pred_region
          %s139 = sand.u32 %s51, 1
          %s140 = scalar_lea.sflag [#allocation7], %s139
          %s141 = sand.u32 %s51, 1
          %s142 = smul.addr %s141, 16
          %s143 = scalar_lea.vmem [#allocation6], %s142
          %s144 = smul.u32 2, %s15
          %s145 = ssub.s32 3, %s144
          %p146 = scmp.lt.s32.totalorder %s145, 2
          %s147 = scalar_select %p146, %s145, 2
          %s148 = smul.u32 8, %s147
          %s149 = ssub.s32 16, %s148
          %s150 = sshll.u32 %s149, 4
          %151 = vsyncadd %s140, %s150
          %p152 = scmp.ne.s32.totalorder 0, %s148
          %s153 = smul.addr %s144, 8
          %s154 = scalar_lea.hbm %s1, %s153
          %s155 = smul.u32 8, %s147
          %s156 = sshll.u32 %s154, 4
          %s157 = int_to_ptr.hbm [resolvable:$true] %s156
          %s158 = sshll.u32 %s143, 4
          %s159 = int_to_ptr.vmem [resolvable:$true] %s158
          %s160 = sshll.u32 %s155, 4
          %164 = dma.hbm_to_vmem [thread:$0]  (%p152), %s157, %s160, %s159, %s140, 128, 128, 8
        $region24: #{tpu_custom_call.1} parent=15 // pred_fallthru
          _
      $region16: #{tpu_custom_call.1} parent=5 // pred_fallthru
        _
      %p165 = scmp.le.s32.totalorder 1, %s15
      %p166 = scmp.lt.s32.totalorder %s15, 3
      %p167 = pnand %p165, %p166
      %p168 = pneg %p167
      // Predicated region
      $region25: #{tpu_custom_call.1} parent=5 // pred_check
        _
      $region26: #{tpu_custom_call.1} parent=5 // pred_check_branch
        %170 = sbr.rel (%p167) target = $region28
      $region27: #{tpu_custom_call.1} parent=5 // pred_region
        %s171 = ssub.s32 %s15, 1
        %s172 = sand.u32 %s28, 1
        %s173 = scalar_lea.sflag [#allocation4], %s172
        %s174 = sand.u32 %s28, 1
        %s175 = smul.addr %s174, 16
        %s176 = scalar_lea.vmem [#allocation3], %s175
        // Predicated region
        $region29: #{tpu_custom_call.1} parent=27 // pred_check
          %p177 = pneg %p41
        $region30: #{tpu_custom_call.1} parent=27 // pred_check_branch
          %179 = sbr.rel (%p177) target = $region32
        $region31: #{tpu_custom_call.1} parent=27 // pred_region
          %181 = dma.done %s173, 256
        $region32: #{tpu_custom_call.1} parent=27 // pred_fallthru
          _
        %s182 = sand.u32 %s54, 1
        %s183 = scalar_lea.sflag [#allocation7], %s182
        %s184 = sand.u32 %s54, 1
        %s185 = smul.addr %s184, 16
        %s186 = scalar_lea.vmem [#allocation6], %s185
        // Predicated region
        $region33: #{tpu_custom_call.1} parent=27 // pred_check
          %p187 = pneg %p67
        $region34: #{tpu_custom_call.1} parent=27 // pred_check_branch
          %189 = sbr.rel (%p187) target = $region36
        $region35: #{tpu_custom_call.1} parent=27 // pred_region
          %191 = dma.done %s183, 256
        $region36: #{tpu_custom_call.1} parent=27 // pred_fallthru
          _
        %s192 = sand.u32 %s28, 1
        %s193 = scalar_lea.sflag [#allocation4], %s192
        %s194 = sand.u32 %s28, 1
        %s195 = smul.addr %s194, 16
        %s196 = scalar_lea.vmem [#allocation3], %s195
        %p197 = pneg %p41
        %p198 = pneg %p38
        %s199 = sand.u32 %s54, 1
        %s200 = scalar_lea.sflag [#allocation7], %s199
        %s201 = sand.u32 %s54, 1
        %s202 = smul.addr %s201, 16
        %s203 = scalar_lea.vmem [#allocation6], %s202
        %p204 = pneg %p67
        %p205 = pneg %p64
        %p206 = pneg %p88
        %p207 = pneg %p85
        %s208 = smul.u32 2, %s20
        %s209 = ssub.s32 3, %s208
        %p210 = scmp.lt.s32.totalorder %s209, 2
        %s211 = scalar_select %p210, %s209, 2
        %s212 = smul.u32 8, %s211
        %s213 = smul.u32 2, %s20
        %s214 = ssub.s32 3, %s213
        %p215 = scmp.lt.s32.totalorder %s214, 2
        %s216 = scalar_select %p215, %s214, 2
        %s217 = smul.u32 8, %s216
        %p218 = scmp.eq.s32.totalorder %s20, 0
        // Predicated region
        $region37: #{tpu_custom_call.1} parent=27 // pred_check
          %p219 = pneg %p218
        $region38: #{tpu_custom_call.1} parent=27 // pred_check_branch
          %221 = sbr.rel (%p219) target = $region40
        $region39: #{tpu_custom_call.1} parent=27 // pred_region
          %222 = vst [vmem:[#allocation2] sm:$0xff] 0.0
          %223 = vst [vmem:[#allocation2 + $0x8] sm:$0xff] 0.0
        $region40: #{tpu_custom_call.1} parent=27 // pred_fallthru
          _
        %v224 = vld [vmem:[%s176] sm:$0xff]
        %v225 = vld [vmem:[%s176 + $0x8] sm:$0xff]
        %v226 = vld [vmem:[%s186] sm:$0xff]
        %v227 = vld [vmem:[%s186 + $0x8] sm:$0xff]
        %v228 = vand.u32 2147483647, %v224
        %v229 = vand.u32 2147483647, %v225
        %v230 = vsub.f32 0.0, %v228
        %v231 = vsub.f32 0.0, %v229
        %v232 = vmul.f32 %v230, 1.442695
        %v233 = vpow.pop %v232
        %v234 = vmul.f32 %v231, 1.442695
        %v235 = vpow.pop %v234
        %v236 = vmax.f32 %v224, 0.0
        %v237 = vmax.f32 %v225, 0.0
        %v238 = vmul.f32 %v224, %v226
        %v239 = vmul.f32 %v225, %v227
        %v240 = vsub.f32 %v236, %v238
        %v241 = vsub.f32 %v237, %v239
        %v242 = vadd.f32 %v233, 1.0
        %v243 = vlog2.pop %v242
        %v244 = vmul.f32 %v243, 0.6931472
        %v245 = vmul.f32 -0.5, %v233
        %v246 = vadd.f32 %v245, 1.0
        %v247 = vmul.f32 %v246, %v233
        %v248 = vand.u32 2147483647, %v233
        %vm249 = vcmp.lt.f32.partialorder %v248, 0.0004427343
        %v250 = vsel %vm249, %v247, %v244
        %v251 = vadd.f32 %v235, 1.0
        %v252 = vlog2.pop %v251
        %v253 = vmul.f32 %v252, 0.6931472
        %v254 = vmul.f32 -0.5, %v235
        %v255 = vadd.f32 %v254, 1.0
        %v256 = vmul.f32 %v255, %v235
        %v257 = vand.u32 2147483647, %v235
        %vm258 = vcmp.lt.f32.partialorder %v257, 0.0004427343
        %v259 = vsel %vm258, %v256, %v253
        %v260 = vadd.f32 %v240, %v250
        %v261 = vadd.f32 %v241, %v259
        %v262 = vadd.f32 %v233, 1.0
        %v263 = vadd.f32 %v235, 1.0
        %v264 = vrcp.pop %v262
        %v265 = vmul.f32 %v262, %v264
        %v266 = vsub.f32 1.0, %v265
        %v267 = vmul.f32 %v264, %v266
        %v268 = vadd.f32 %v264, %v267
        %vm269 = vweird.f32 %v262
        %vm270 = vweird.f32 %v264
        %vm271 = vmor %vm269, %vm270
        %v272 = vsel %vm271, %v264, %v268
        %v273 = vand.u32 2147483647, %v262
        %vm274 = vcmp.eq.f32.partialorder %v273, 8.507059e+37
        %v275 = vand.u32 %v262, 2147483648
        %v276 = vor.u32 1.1754944e-38, %v275
        %v277 = vsel %vm274, %v276, %v272
        %v278 = vmul.f32 1.0, %v277
        %v279 = vrcp.pop %v263
        %v280 = vmul.f32 %v263, %v279
        %v281 = vsub.f32 1.0, %v280
        %v282 = vmul.f32 %v279, %v281
        %v283 = vadd.f32 %v279, %v282
        %vm284 = vweird.f32 %v263
        %vm285 = vweird.f32 %v279
        %vm286 = vmor %vm284, %vm285
        %v287 = vsel %vm286, %v279, %v283
        %v288 = vand.u32 2147483647, %v263
        %vm289 = vcmp.eq.f32.partialorder %v288, 8.507059e+37
        %v290 = vand.u32 %v263, 2147483648
        %v291 = vor.u32 1.1754944e-38, %v290
        %v292 = vsel %vm289, %v291, %v287
        %v293 = vmul.f32 1.0, %v292
        %vm294 = vcmp.ge.f32.partialorder %v224, 0.0
        %vm295 = vcmp.ge.f32.partialorder %v225, 0.0
        %v296 = vsub.f32 1.0, %v278
        %v297 = vsub.f32 1.0, %v293
        %v298 = vsel %vm294, %v278, %v296
        %v299 = vsel %vm295, %v293, %v297
        %v300 = vmul.f32 %v298, 2.0
        %v301 = vmul.f32 %v299, 2.0
        %v302 = vsub.f32 1.0, %v300
        %v303 = vsub.f32 1.0, %v301
        %v304 = vmul.f32 %v226, %v302
        %v305 = vmul.f32 %v227, %v303
        %v306 = vadd.f32 %v298, %v304
        %v307 = vadd.f32 %v299, %v305
        %v308 = vrsqrt.pop %v306
        %v309 = vmul.f32 %v308, %v306
        %v310 = vmul.f32 %v309, %v308
        %v311 = vmul.f32 0.5, %v310
        %v312 = vsub.f32 1.5, %v311
        %v313 = vmul.f32 %v308, %v312
        %v314 = vmul.f32 %v306, %v313
        %vm315 = vcmp.eq.f32.partialorder %v306, inf
        %v316 = vsel %vm315, %v306, %v314
        %vm317 = vcmp.eq.f32.partialorder %v306, 0.0
        %v318 = vand.u32 %v306, 2147483648
        %v319 = vsel %vm317, %v318, %v316
        %v320 = vrsqrt.pop %v307
        %v321 = vmul.f32 %v320, %v307
        %v322 = vmul.f32 %v321, %v320
        %v323 = vmul.f32 0.5, %v322
        %v324 = vsub.f32 1.5, %v323
        %v325 = vmul.f32 %v320, %v324
        %v326 = vmul.f32 %v307, %v325
        %vm327 = vcmp.eq.f32.partialorder %v307, inf
        %v328 = vsel %vm327, %v307, %v326
        %vm329 = vcmp.eq.f32.partialorder %v307, 0.0
        %v330 = vand.u32 %v307, 2147483648
        %v331 = vsel %vm329, %v330, %v328
        %v332 = vmul.f32 %v306, %v319
        %v333 = vmul.f32 %v307, %v331
        %v334 = vmul.f32 %v260, %v332
        %v335 = vmul.f32 %v261, %v333
        %v336 = vmul.f32 %v226, -0.5
        %v337 = vmul.f32 %v227, -0.5
        %v338 = vadd.f32 %v336, 0.75
        %v339 = vadd.f32 %v337, 0.75
        %v340 = vmul.f32 %v334, %v338
        %v341 = vmul.f32 %v335, %v339
        %s342 = smul.u32 %s20, 16
        %v343 = vlaneseq
        %v344 = vshrl.u32 %v343, 7
        %v345 = vadd.s32 %v344, 8
        %v346 = vstv %s342
        %v347 = vadd.s32 %v346, %v344
        %v348 = vadd.s32 %v346, %v345
        %vm349 = vcmp.lt.s32.totalorder %v347, 20
        %vm350 = vcmp.lt.s32.totalorder %v348, 20
        %v351 = vsel %vm349, %v340, 0.0
        %v352 = vsel %vm350, %v341, 0.0
        %v353 = vld [vmem:[#allocation2] sm:$0xff]
        %v354 = vld [vmem:[#allocation2 + $0x8] sm:$0xff]
        %v355 = vadd.f32 %v353, %v351
        %v356 = vadd.f32 %v354, %v352
        %357 = vst [vmem:[#allocation2] sm:$0xff] %v355
        %358 = vst [vmem:[#allocation2 + $0x8] sm:$0xff] %v356
        %p359 = scmp.eq.s32.totalorder %s20, 1
        // Predicated region
        $region41: #{tpu_custom_call.1} parent=27 // pred_check
          %p360 = pneg %p359
        $region42: #{tpu_custom_call.1} parent=27 // pred_check_branch
          %362 = sbr.rel (%p360) target = $region44
        $region43: #{tpu_custom_call.1} parent=27 // pred_region
          %v363 = vld [vmem:[#allocation2] sm:$0xff]
          %v364 = vld [vmem:[#allocation2 + $0x8] sm:$0xff]
          %v365 = vadd.f32 %v363, %v364
          %366 = vadd.xlane.f32.xlu0 %v365
          %v367 = vpop.xlane.xlu0 %366
          %v368 = vrot.slane %v367, 4
          %v369 = vadd.f32 %v367, %v368
          %v370 = vrot.slane %v369, 2
          %v371 = vadd.f32 %v369, %v370
          %v372 = vrot.slane %v371, 1
          %v373 = vadd.f32 %v371, %v372
          %s374 = vtos %v373
          %s375 = smul.f32 %s374, 0.0078125
          %s376 = scalar_lea.smem [#allocation8], 0
          %377 = sst [smem:[%s376]] %s375
        $region44: #{tpu_custom_call.1} parent=27 // pred_fallthru
          _
        // Predicated region
        $region45: #{tpu_custom_call.1} parent=27 // pred_check
          %p378 = pneg %p85
        $region46: #{tpu_custom_call.1} parent=27 // pred_check_branch
          %380 = sbr.rel (%p378) target = $region48
        $region47: #{tpu_custom_call.1} parent=27 // pred_region
          %382 = vsyncadd [#allocation5], 0
          %s384 = sshll.u32 %s2, 4
          %s385 = int_to_ptr.hbm [resolvable:$true] %s384
          %387 = dma.smem_to_hbm [#allocation8], 16, %s385, [#allocation5]
        $region48: #{tpu_custom_call.1} parent=27 // pred_fallthru
          _
        // Predicated region
        $region49: #{tpu_custom_call.1} parent=27 // pred_check
          %p388 = pneg %p85
        $region50: #{tpu_custom_call.1} parent=27 // pred_check_branch
          %390 = sbr.rel (%p388) target = $region52
        $region51: #{tpu_custom_call.1} parent=27 // pred_region
          %392 = dma.done [#allocation5], 16
        $region52: #{tpu_custom_call.1} parent=27 // pred_fallthru
          _
        %393 = sfence
      $region28: #{tpu_custom_call.1} parent=5 // pred_fallthru
        _
      %p394 = scmp.le.s32.totalorder 2, %s15
      // Predicated region
      $region53: #{tpu_custom_call.1} parent=5 // pred_check
        %p395 = pneg %p394
      $region54: #{tpu_custom_call.1} parent=5 // pred_check_branch
        %397 = sbr.rel (%p395) target = $region56
      $region55: #{tpu_custom_call.1} parent=5 // pred_region
        %s398 = ssub.s32 %s15, 2
      $region56: #{tpu_custom_call.1} parent=5 // pred_fallthru
        _
    $region6: #{tpu_custom_call.1} parent=1 // loop_footer
      %s19 = sadd.s32 1, %s15
    $region7: #{tpu_custom_call.1} parent=1 // loop_footer_branch
      %14 = sbr.rel target = $region3
    $region8: #{tpu_custom_call.1} parent=1 // loop_exit
      _
    %399 = vsyncpa [#allocation4], 1
    %s400 = scalar_lea.sflag [#allocation4], 1
    %401 = vsyncpa %s400, 1
    %402 = vsyncpa [#allocation7], 1
    %s403 = scalar_lea.sflag [#allocation7], 1
    %404 = vsyncpa %s403, 1
    %405 = vsyncpa [#allocation5], 1
    %s406 = scalar_lea.sflag [#allocation5], 1
    %407 = vsyncpa %s406, 1

</llo_original>
